<compile_context>
chip_gen: v5e
topology: v5e:2x2
jax: 0.10.0
libtpu: 0.0.40
codegen_flags: <defaults>
</compile_context>

<pallas_src>
import jax
import jax.numpy as jnp
from jax.experimental import pallas as pl
from jax.experimental.pallas import tpu as pltpu

EPS = 1e-5  # nn.LayerNorm default


def _round_up(x, m):
    return (x + m - 1) // m * m


def _vmem_budget_bytes():
    """Per-generation VMEM budget, leaving headroom for compiler scratch/sems."""
    cap = 64 << 20  # conservative default: v7x per-TensorCore VMEM
    try:
        info = pltpu.get_tpu_info()
        c = getattr(info, "vmem_capacity_bytes", None)
        if c:
            cap = int(c)
    except Exception:
        pass
    # ~96 MiB on 128 MiB parts (v5e/v6e), ~48 MiB on 64 MiB parts (v7x).
    return int(min(cap * 3 // 4, 100 << 20))


def _choose_tm(M, tm_cap):
    """Row tile <= tm_cap (multiple of 8); prefer one that divides M so the
    wrapper never materializes a padded HBM copy of the activations."""
    Mp8 = _round_up(M, 8)
    cap = max(8, min((tm_cap // 8) * 8, Mp8))
    for tm in range(cap, 7, -8):
        if M % tm == 0:
            return tm, M
    return cap, _round_up(M, cap)


def _split_for_megacore(M, tm, Mp):
    """v7x has 2 TensorCores: make sure the 'parallel' row axis has >= 2 tiles
    (no-op cost on v5e/v6e)."""
    if Mp // tm < 2 and Mp >= 16:
        tm = _round_up((Mp + 1) // 2, 8)
        Mp = _round_up(M, tm)
    return tm, Mp


# --------------------- fused LayerNorm + Linear kernel -----------------------
def _prenorm_linear_kernel(x_ref, gamma_ref, beta_ref, w_ref, b_ref, o_ref, xn_ref):
    # INVARIANT (correctness): grid axis 1 (j = output-feature tiles) must stay
    # the innermost, sequentially executed ("arbitrary") axis.  xn_ref is only
    # written at j == 0 and reused for j > 0 of the same row tile i; reordering
    # the grid or marking j "parallel" would read a stale scratch.
    j = pl.program_id(1)

    @pl.when(j == 0)
    def _():
        x = x_ref[...].astype(jnp.float32)                       # (tm, D)
        mean = jnp.mean(x, axis=-1, keepdims=True)
        xc = x - mean
        var = jnp.mean(xc * xc, axis=-1, keepdims=True)
        xn = xc * jax.lax.rsqrt(var + EPS)
        xn = (xn * gamma_ref[...].astype(jnp.float32)
              + beta_ref[...].astype(jnp.float32))
        xn_ref[...] = xn.astype(xn_ref.dtype)                    # bf16 MXU cache

    # bf16 x bf16 -> f32 accumulation on the MXU; bias added in f32.
    acc = jnp.dot(xn_ref[...], w_ref[...], preferred_element_type=jnp.float32)
    o_ref[...] = (acc + b_ref[...].astype(jnp.float32)).astype(o_ref.dtype)


def pre_norm_linear(x, gamma, beta, w, b):
    """Fused PreNorm with fn = Linear(D, H).  x: (B, S, D), w: (D, H), b: (H,)."""
    B, S, D = x.shape
    H = w.shape[1]
    M = B * S

    in_is = jnp.dtype(x.dtype).itemsize
    out_is = in_is
    budget = _vmem_budget_bytes()

    x2d = x.reshape(M, D)
    gamma2d = gamma.reshape(1, D).astype(jnp.float32)
    beta2d = beta.reshape(1, D).astype(jnp.float32)

    # Lane-dense output features; bf16 weight halves HBM traffic and is
    # MXU-native on all current generations.
    Hp = _round_up(H, 128)
    wp = w if Hp == H else jnp.pad(w, ((0, 0), (0, Hp - H)))
    wp = wp.astype(jnp.bfloat16)
    bp = (b if Hp == H else jnp.pad(b, (0, Hp - H))).reshape(1, Hp).astype(jnp.float32)

    # --- output-feature tiling / weight residency ---------------------------
    w_bytes = D * Hp * 2  # bf16
    resident = 2 * w_bytes <= budget // 2        # full W stays in VMEM across all i
    if resident:
        tn = Hp
        w_depth = 2
    else:
        tn = next(c for c in (512, 256, 128) if Hp % c == 0)
        w_depth = 3                              # hide the per-j weight-stripe DMA

    # --- row tiling sized against the remaining VMEM budget -----------------
    fixed = w_depth * D * tn * 2 + 2 * (2 * D * 4 + 2 * tn * 4)
    per_row = 2 * D * in_is + 2 * tn * out_is + D * 2   # x(2 bufs) + out(2 bufs) + xn scratch
    avail = max(budget - fixed - (4 << 20), 8 * per_row)
    tm_cap = int(min(1024, max(8, avail // per_row)))
    tm, Mp = _choose_tm(M, tm_cap)
    tm, Mp = _split_for_megacore(M, tm, Mp)

    xp = x2d if Mp == M else jnp.pad(x2d, ((0, Mp - M), (0, 0)))

    n_row_tiles = Mp // tm
    grid = (n_row_tiles, Hp // tn)

    # VMEM actually used (no double-counting of buffering).
    vmem_need = (2 * tm * D * in_is + 2 * tm * tn * out_is
                 + w_depth * D * tn * 2 + tm * D * 2
                 + 2 * (2 * D * 4 + 2 * tn * 4))
    vmem_limit = int(min(budget, max(vmem_need + (6 << 20), 32 << 20)))

    weight_reads = 1 if resident else n_row_tiles
    cost = pl.CostEstimate(
        flops=2 * Mp * D * Hp,
        transcendentals=0,
        bytes_accessed=int(xp.size * in_is
                           + weight_reads * D * Hp * 2
                           + 2 * D * 4
                           + n_row_tiles * Hp * 4
                           + Mp * Hp * out_is),
    )

    # Weight BlockSpec: resident (constant block index => single DMA) or
    # striped with a deeper pipeline.
    if w_depth > 2:
        try:
            w_spec = pl.BlockSpec((D, tn), lambda i, j: (0, j),
                                  pipeline_mode=pl.Buffered(w_depth))
        except TypeError:  # older jax without pipeline_mode kwarg
            w_spec = pl.BlockSpec((D, tn), lambda i, j: (0, j))
    else:
        w_spec = pl.BlockSpec((D, tn), lambda i, j: (0, j))

    out = pl.pallas_call(
        _prenorm_linear_kernel,
        out_shape=jax.ShapeDtypeStruct((Mp, Hp), x.dtype),
        grid_spec=pltpu.PrefetchScalarGridSpec(
            num_scalar_prefetch=0,
            grid=grid,
            in_specs=[
                pl.BlockSpec((tm, D), lambda i, j: (i, 0)),   # activations
                pl.BlockSpec((1, D), lambda i, j: (0, 0)),    # gamma (constant)
                pl.BlockSpec((1, D), lambda i, j: (0, 0)),    # beta  (constant)
                w_spec,                                        # weight (bf16)
                pl.BlockSpec((1, tn), lambda i, j: (0, j)),   # bias stripe
            ],
            out_specs=pl.BlockSpec((tm, tn), lambda i, j: (i, j)),
            scratch_shapes=[pltpu.VMEM((tm, D), jnp.bfloat16)],  # cached normed x
        ),
        compiler_params=pltpu.CompilerParams(
            dimension_semantics=("parallel", "arbitrary"),
            vmem_limit_bytes=vmem_limit,
        ),
        cost_estimate=cost,
    )(xp, gamma2d, beta2d, wp, bp)

    return out[:M, :H].reshape(B, S, H)


# ----------------- standalone LayerNorm kernel (generic fn path) -------------
def _layernorm_kernel(x_ref, gamma_ref, beta_ref, o_ref):
    x = x_ref[...].astype(jnp.float32)                           # (tm, D)
    mean = jnp.mean(x, axis=-1, keepdims=True)
    xc = x - mean
    var = jnp.mean(xc * xc, axis=-1, keepdims=True)
    xn = xc * jax.lax.rsqrt(var + EPS)
    y = (xn * gamma_ref[...].astype(jnp.float32)
         + beta_ref[...].astype(jnp.float32))
    o_ref[...] = y.astype(o_ref.dtype)


def layer_norm_pallas(x2d, gamma, beta):
    """x2d: (M, D); gamma/beta: (D,) or (1, D).  tm sized against VMEM budget."""
    M, D = x2d.shape
    itemsize = jnp.dtype(x2d.dtype).itemsize
    budget = _vmem_budget_bytes()

    per_row = 2 * D * itemsize + 2 * D * itemsize   # input + output, double-buffered
    tm_cap = int(min(1024, max(8, (budget - (4 << 20)) // per_row)))
    tm, Mp = _choose_tm(M, tm_cap)
    tm, Mp = _split_for_megacore(M, tm, Mp)

    xp = x2d if Mp == M else jnp.pad(x2d, ((0, Mp - M), (0, 0)))

    vmem_need = 4 * tm * D * itemsize + 2 * 2 * D * 4
    vmem_limit = int(min(budget, max(vmem_need + (4 << 20), 32 << 20)))

    out = pl.pallas_call(
        _layernorm_kernel,
        out_shape=jax.ShapeDtypeStruct((Mp, D), x2d.dtype),
        grid_spec=pltpu.PrefetchScalarGridSpec(
            num_scalar_prefetch=0,
            grid=(Mp // tm,),
            in_specs=[
                pl.BlockSpec((tm, D), lambda i: (i, 0)),
                pl.BlockSpec((1, D), lambda i: (0, 0)),
                pl.BlockSpec((1, D), lambda i: (0, 0)),
            ],
            out_specs=pl.BlockSpec((tm, D), lambda i: (i, 0)),
        ),
        compiler_params=pltpu.CompilerParams(
            dimension_semantics=("parallel",),
            vmem_limit_bytes=vmem_limit,
        ),
    )(xp, gamma.reshape(1, D).astype(jnp.float32),
      beta.reshape(1, D).astype(jnp.float32))
    return out[:M]


def pre_norm(x, gamma, beta, fn, **kwargs):
    """Generic PreNorm: fn(LayerNorm(x), **kwargs), fn is any JAX callable.

    Prefer pre_norm_linear when fn starts with a matmul: it avoids the HBM
    round-trip of the normalized activations.
    """
    B, S, D = x.shape
    normed = layer_norm_pallas(x.reshape(B * S, D), gamma, beta)
    return fn(normed.reshape(B, S, D), **kwargs)


# ----------------------------------- demo ------------------------------------
if __name__ == "__main__":
    key = jax.random.PRNGKey(0)
    B, S, D, H = 2, 8, 128, 128   # lane-dense feature dims

    kx, kw, kb = jax.random.split(key, 3)
    x = jax.random.normal(kx, (B, S, D), dtype=jnp.float32)

    # LayerNorm params (PyTorch default init: weight=1, bias=0).
    gamma = jnp.ones((D,), jnp.float32)
    beta = jnp.zeros((D,), jnp.float32)

    # Params for the wrapped fn (example: Linear(D, H)).
    w = jax.random.normal(kw, (D, H), dtype=jnp.float32) * 0.02
    b = jax.random.normal(kb, (H,), dtype=jnp.float32) * 0.02

    # Fused PreNorm + Linear (single pallas_call, bf16 MXU path).
    out = pre_norm_linear(x, gamma, beta, w, b)
    out = jax.block_until_ready(out)

    # Generic PreNorm path (LayerNorm kernel, arbitrary fn; f32 matmul outside).
    out_generic = pre_norm(x, gamma, beta, lambda y: y @ w + b)
    out_generic = jax.block_until_ready(out_generic)

    # Silent correctness check against a pure-JAX reference.
    xf = x.astype(jnp.float32)
    mean = jnp.mean(xf, axis=-1, keepdims=True)
    var = jnp.mean((xf - mean) ** 2, axis=-1, keepdims=True)
    ref_norm = (xf - mean) * jax.lax.rsqrt(var + EPS) * gamma + beta
    ref = ref_norm @ w + b

    assert out.shape == (B, S, H)
    # Fused path uses bf16 MXU inputs with f32 accumulation -> looser tolerance.
    assert jnp.allclose(out, ref, atol=2e-2, rtol=2e-2)
    assert out_generic.shape == (B, S, H)
    assert jnp.allclose(out_generic, ref, atol=1e-4, rtol=1e-4)

    print("KERNEL_OK")
</pallas_src>

<mosaic_0001>
module attributes {stable_mosaic.version = 11 : i64} {
  func.func @_prenorm_linear_kernel(%arg0: i32, %arg1: i32, %arg2: memref<8x128xf32, #tpu.memory_space<vmem>>, %arg3: memref<1x128xf32, #tpu.memory_space<vmem>>, %arg4: memref<1x128xf32, #tpu.memory_space<vmem>>, %arg5: memref<128x128xbf16, #tpu.memory_space<vmem>>, %arg6: memref<1x128xf32, #tpu.memory_space<vmem>>, %arg7: memref<8x128xf32, #tpu.memory_space<vmem>>, %arg8: memref<8x128xbf16, #tpu.memory_space<vmem>>) attributes {dimension_semantics = [#tpu.dimension_semantics<parallel>, #tpu.dimension_semantics<arbitrary>], iteration_bounds = array<i64: 2, 1>, scalar_prefetch = 0 : i64, scratch_operands = 1 : i64, tpu.core_type = #tpu.core_type<tc>, window_params = [{transform_indices = @transform_0, window_bounds = array<i64: 8, 128>}, {pipeline_mode = #tpu.pipeline_mode<synchronous>, transform_indices = @transform_1, window_bounds = array<i64: 1, 128>}, {pipeline_mode = #tpu.pipeline_mode<synchronous>, transform_indices = @transform_2, window_bounds = array<i64: 1, 128>}, {transform_indices = @transform_3, window_bounds = array<i64: 128, 128>}, {transform_indices = @transform_4, window_bounds = array<i64: 1, 128>}, {transform_indices = @transform_5, window_bounds = array<i64: 8, 128>}]} {
    %c0_i32 = arith.constant 0 : i32
    %0 = arith.cmpi eq, %arg1, %c0_i32 : i32
    %1 = arith.extui %0 : i1 to i32
    %c0_i32_0 = arith.constant 0 : i32
    %2 = arith.cmpi ne, %1, %c0_i32_0 : i32
    scf.if %2 {
      %c0_8 = arith.constant 0 : index
      %c0_9 = arith.constant 0 : index
      %10 = vector.load %arg2[%c0_8, %c0_9] : memref<8x128xf32, #tpu.memory_space<vmem>>, vector<8x128xf32>
      %cst_10 = arith.constant dense<0.000000e+00> : vector<8xf32>
      %11 = vector.multi_reduction <add>, %10, %cst_10 [1] : vector<8x128xf32> to vector<8xf32>
      %12 = vector.shape_cast %11 : vector<8xf32> to vector<8x1xf32>
      %cst_11 = arith.constant 1.280000e+02 : f32
      %13 = vector.broadcast %cst_11 : f32 to vector<8x1xf32>
      %14 = arith.divf %12, %13 : vector<8x1xf32>
      %15 = vector.broadcast %14 : vector<8x1xf32> to vector<8x128xf32>
      %16 = arith.subf %10, %15 : vector<8x128xf32>
      %17 = arith.mulf %16, %16 : vector<8x128xf32>
      %cst_12 = arith.constant dense<0.000000e+00> : vector<8xf32>
      %18 = vector.multi_reduction <add>, %17, %cst_12 [1] : vector<8x128xf32> to vector<8xf32>
      %19 = vector.shape_cast %18 : vector<8xf32> to vector<8x1xf32>
      %cst_13 = arith.constant 1.280000e+02 : f32
      %20 = vector.broadcast %cst_13 : f32 to vector<8x1xf32>
      %21 = arith.divf %19, %20 : vector<8x1xf32>
      %cst_14 = arith.constant 9.99999974E-6 : f32
      %22 = vector.broadcast %cst_14 : f32 to vector<8x1xf32>
      %23 = arith.addf %21, %22 : vector<8x1xf32>
      %24 = math.rsqrt %23 : vector<8x1xf32>
      %25 = vector.broadcast %24 : vector<8x1xf32> to vector<8x128xf32>
      %26 = arith.mulf %16, %25 : vector<8x128xf32>
      %c0_15 = arith.constant 0 : index
      %c0_16 = arith.constant 0 : index
      %27 = vector.load %arg3[%c0_15, %c0_16] : memref<1x128xf32, #tpu.memory_space<vmem>>, vector<1x128xf32>
      %28 = vector.broadcast %27 : vector<1x128xf32> to vector<8x128xf32>
      %29 = arith.mulf %26, %28 : vector<8x128xf32>
      %c0_17 = arith.constant 0 : index
      %c0_18 = arith.constant 0 : index
      %30 = vector.load %arg4[%c0_17, %c0_18] : memref<1x128xf32, #tpu.memory_space<vmem>>, vector<1x128xf32>
      %31 = vector.broadcast %30 : vector<1x128xf32> to vector<8x128xf32>
      %32 = arith.addf %29, %31 : vector<8x128xf32>
      %33 = arith.truncf %32 : vector<8x128xf32> to vector<8x128xbf16>
      %c0_19 = arith.constant 0 : index
      %c0_20 = arith.constant 0 : index
      %34 = vector.load %arg8[%c0_19, %c0_20] : memref<8x128xbf16, #tpu.memory_space<vmem>>, vector<8x128xbf16>
      tpu.vector_store %arg8[%c0_19, %c0_20], %33 {strides = array<i32>} : memref<8x128xbf16, #tpu.memory_space<vmem>>, vector<8x128xbf16>,
    } else {
    }
    %c0 = arith.constant 0 : index
    %c0_1 = arith.constant 0 : index
    %3 = vector.load %arg8[%c0, %c0_1] : memref<8x128xbf16, #tpu.memory_space<vmem>>, vector<8x128xbf16>
    %c0_2 = arith.constant 0 : index
    %c0_3 = arith.constant 0 : index
    %4 = vector.load %arg5[%c0_2, %c0_3] : memref<128x128xbf16, #tpu.memory_space<vmem>>, vector<128x128xbf16>
    %cst = arith.constant dense<0.000000e+00> : vector<8x128xf32>
    %5 = tpu.matmul %3, %4, %cst {dimension_numbers = #tpu.dot_dimension_numbers<[1], [0], [0], [1], [0, 0, 1, 1], [], []>} : vector<8x128xbf16>, vector<128x128xbf16>, vector<8x128xf32> -> vector<8x128xf32>
    %c0_4 = arith.constant 0 : index
    %c0_5 = arith.constant 0 : index
    %6 = vector.load %arg6[%c0_4, %c0_5] : memref<1x128xf32, #tpu.memory_space<vmem>>, vector<1x128xf32>
    %7 = vector.broadcast %6 : vector<1x128xf32> to vector<8x128xf32>
    %8 = arith.addf %5, %7 : vector<8x128xf32>
    %c0_6 = arith.constant 0 : index
    %c0_7 = arith.constant 0 : index
    %9 = vector.load %arg7[%c0_6, %c0_7] : memref<8x128xf32, #tpu.memory_space<vmem>>, vector<8x128xf32>
    tpu.vector_store %arg7[%c0_6, %c0_7], %8 {strides = array<i32>} : memref<8x128xf32, #tpu.memory_space<vmem>>, vector<8x128xf32>,
    return
  }
  func.func @transform_0(%arg0: i32, %arg1: i32) -> (i32, i32) {
    %c0_i32 = arith.constant 0 : i32
    %c0_i32_0 = arith.constant 0 : i32
    return %arg0, %c0_i32 : i32, i32
  }
  func.func @transform_1(%arg0: i32, %arg1: i32) -> (i32, i32) {
    %c0_i32 = arith.constant 0 : i32
    %c0_i32_0 = arith.constant 0 : i32
    %c0_i32_1 = arith.constant 0 : i32
    return %c0_i32, %c0_i32_0 : i32, i32
  }
  func.func @transform_2(%arg0: i32, %arg1: i32) -> (i32, i32) {
    %c0_i32 = arith.constant 0 : i32
    %c0_i32_0 = arith.constant 0 : i32
    %c0_i32_1 = arith.constant 0 : i32
    return %c0_i32, %c0_i32_0 : i32, i32
  }
  func.func @transform_3(%arg0: i32, %arg1: i32) -> (i32, i32) {
    %c0_i32 = arith.constant 0 : i32
    %c0_i32_0 = arith.constant 0 : i32
    return %c0_i32, %arg1 : i32, i32
  }
  func.func @transform_4(%arg0: i32, %arg1: i32) -> (i32, i32) {
    %c0_i32 = arith.constant 0 : i32
    %c0_i32_0 = arith.constant 0 : i32
    return %c0_i32, %arg1 : i32, i32
  }
  func.func @transform_5(%arg0: i32, %arg1: i32) -> (i32, i32) {
    %c0_i32 = arith.constant 0 : i32
    return %arg0, %arg1 : i32, i32
  }
}

</mosaic_0001>

<llo_original>
// kernel: tpu_custom_call.1
$region0: #{tpu_custom_call.1}
  #allocation0 [shape = 'u32[]', space=smem, size = 0x4, offset = 0x4, fixed_abs, tag = 'smem constant byte address 0x4 - core index']
  #allocation1 [shape = 'u32[72,128]{1,0:T(1,128)}', space=vmem, size = 0x9000, scoped, tag = 'internal scratch']
  #allocation2 [shape = 'bf16[8,128]{1,0:T(8,128)(2,1)}', space=vmem, size = 0x800, scoped, tag = 'scratch operand']
  %s0 = inlined_call_operand.hbm [shape: f32[16,128], index: 0, kind: input, shape index: {}]
  %s1 = inlined_call_operand.hbm [shape: f32[1,128], index: 1, kind: input, shape index: {}]
  %s2 = inlined_call_operand.vmem [shape: f32[1,128], index: 2, kind: input, shape index: {}]
  %s3 = inlined_call_operand.hbm [shape: bf16[128,128], index: 3, kind: input, shape index: {}]
  %s4 = inlined_call_operand.vmem [shape: f32[1,128], index: 4, kind: input, shape index: {}]
  %s5 = inlined_call_operand.hbm [shape: f32[16,128], index: 5, kind: output, shape index: {}]
  %s6 = sld [smem:[#allocation0]]
  $region69: #{tpu_custom_call.1} parent=0
    _
  %s8 = ssub.s32 1, %s6
  %s9 = scalar_select 0, %s8, %s6
  $region1: #{tpu_custom_call.1} parent=0
    #allocation3 [shape = 'u8[8192]{0}', space=vmem, size = 0x2000, scoped, tag = 'input window, operand 0']
    #allocation4 [shape = 's32[2]{0}', space=sflag, size = 0x8, scoped, tag = 'scoped memory for tpu_custom_call.1']
    #allocation5 [shape = 's32[2]{0}', space=sflag, size = 0x8, scoped, tag = 'scoped memory for tpu_custom_call.1']
    #allocation6 [shape = 'u8[512]{0}', space=vmem, size = 0x400, scoped, tag = 'input window, operand 1, single buffered']
    #allocation7 [shape = 's32[1]{0}', space=sflag, size = 0x4, scoped, tag = 'scoped memory for tpu_custom_call.1']
    #allocation8 [shape = 'u8[32768]{0}', space=vmem, size = 0x8000, scoped, tag = 'input window, operand 3, single buffered']
    #allocation9 [shape = 'u8[8192]{0}', space=vmem, size = 0x2000, scoped, tag = 'output window, operand 0']
    %10 = vsyncpa [#allocation4], 0
    %s11 = scalar_lea.sflag [#allocation4], 1
    %12 = vsyncpa %s11, 0
    %13 = vsyncpa [#allocation7], 0
    %14 = vsyncpa [#allocation5], 0
    %s15 = scalar_lea.sflag [#allocation5], 1
    %16 = vsyncpa %s15, 0
    loop: start=0, step=1, limit=4
    $region2: #{tpu_custom_call.1} parent=1 // loop_pre_header
      _
    $region3: #{tpu_custom_call.1} parent=1 // loop_header
      %s18 = sphi 0, %s22
      %p19 = scmp.ge.s32.totalorder %s18, 4
      %s25 = sphi 0, %s37
      %s26 = sphi 0, %s33
      %s27 = sphi 0, %s25
      %s28 = sphi 0, %s26
      %s29 = sphi 0, %s27
      %s30 = sphi 0, %s28
      %s40 = sphi 0, %s42
      %s43 = sphi 0, %s40
      %s44 = sphi 0, %s43
      %s60 = sphi 0, %s44
      %s64 = sphi 0, %s64
      %s66 = sphi 0, %s64
      %s67 = sphi 0, %s66
      %s81 = sphi 0, %s67
      %s85 = sphi 0, %s85
      %s87 = sphi 0, %s85
      %s88 = sphi 0, %s87
      %s102 = sphi 0, %s88
      %s108 = sphi 0, %s110
      %s111 = sphi 0, %s108
      %s112 = sphi 0, %s111
      %s128 = sphi 0, %s112
      %s134 = sphi 0, %s136
      %s137 = sphi 0, %s134
      %s138 = sphi 0, %s137
      %s154 = sphi 0, %s138
      %s162 = sphi 0, %s164
      %s165 = sphi 0, %s162
      %s166 = sphi 0, %s165
      %s182 = sphi 0, %s166
    $region4: #{tpu_custom_call.1} parent=1 // loop_header_branch
      %21 = sbr.rel (%p19) target = $region8
    $region5: #{tpu_custom_call.1} parent=1 // loop_body
      %s23 = ssub.s32 %s18, 1
      %s24 = ssub.s32 %s18, 2
      %s31 = sadd.s32 1, %s26
      %p32 = scmp.ge.s32.totalorder %s31, 1
      %s33 = scalar_select %p32, 0, %s31
      %s34 = sadd.s32 1, %s25
      %s35 = scalar_select %p32, %s34, %s25
      %p36 = scmp.ge.s32.totalorder %s35, 2
      %s37 = scalar_select %p36, 0, %s35
      %s38 = ssub.s32 %s25, %s37
      %p39 = scmp.eq.s32.totalorder %s38, 0
      %s41 = sadd.s32 %s40, 1
      %s42 = scalar_select %p39, %s40, %s41
      %p45 = pneg %p39
      %p46 = scmp.eq.s32.totalorder %s18, 1
      %p47 = por %p45, %p46
      %p48 = scmp.ne.s32.totalorder %s40, %s43
      %p49 = scmp.eq.s32.totalorder %s18, 0
      %p50 = por %p48, %p49
      %p51 = scmp.ne.s32.totalorder %s40, %s43
      %p52 = scmp.eq.s32.totalorder %s23, 1
      %p53 = por %p51, %p52
      %p54 = scmp.ne.s32.totalorder %s43, %s44
      %p55 = scmp.eq.s32.totalorder %s23, 0
      %p56 = por %p54, %p55
      %p57 = scmp.ne.s32.totalorder %s43, %s44
      %p58 = scmp.eq.s32.totalorder %s24, 1
      %p59 = por %p57, %p58
      %p61 = scmp.ne.s32.totalorder %s44, %s60
      %p62 = scmp.eq.s32.totalorder %s24, 0
      %p63 = por %p61, %p62
      %s65 = sadd.s32 %s64, 1
      %p68 = scmp.eq.s32.totalorder %s18, 1
      %p69 = scmp.ne.s32.totalorder %s64, %s66
      %p70 = scmp.eq.s32.totalorder %s18, 0
      %p71 = por %p69, %p70
      %p72 = scmp.ne.s32.totalorder %s64, %s66
      %p73 = scmp.eq.s32.totalorder %s23, 1
      %p74 = por %p72, %p73
      %p75 = scmp.ne.s32.totalorder %s66, %s67
      %p76 = scmp.eq.s32.totalorder %s23, 0
      %p77 = por %p75, %p76
      %p78 = scmp.ne.s32.totalorder %s66, %s67
      %p79 = scmp.eq.s32.totalorder %s24, 1
      %p80 = por %p78, %p79
      %p82 = scmp.ne.s32.totalorder %s67, %s81
      %p83 = scmp.eq.s32.totalorder %s24, 0
      %p84 = por %p82, %p83
      %s86 = sadd.s32 %s85, 1
      %p89 = scmp.eq.s32.totalorder %s18, 1
      %p90 = scmp.ne.s32.totalorder %s85, %s87
      %p91 = scmp.eq.s32.totalorder %s18, 0
      %p92 = por %p90, %p91
      %p93 = scmp.ne.s32.totalorder %s85, %s87
      %p94 = scmp.eq.s32.totalorder %s23, 1
      %p95 = por %p93, %p94
      %p96 = scmp.ne.s32.totalorder %s87, %s88
      %p97 = scmp.eq.s32.totalorder %s23, 0
      %p98 = por %p96, %p97
      %p99 = scmp.ne.s32.totalorder %s87, %s88
      %p100 = scmp.eq.s32.totalorder %s24, 1
      %p101 = por %p99, %p100
      %p103 = scmp.ne.s32.totalorder %s88, %s102
      %p104 = scmp.eq.s32.totalorder %s24, 0
      %p105 = por %p103, %p104
      %s106 = ssub.s32 %s26, %s33
      %p107 = scmp.eq.s32.totalorder %s106, 0
      %s109 = sadd.s32 %s108, 1
      %s110 = scalar_select %p107, %s108, %s109
      %p113 = pneg %p107
      %p114 = scmp.eq.s32.totalorder %s18, 1
      %p115 = por %p113, %p114
      %p116 = scmp.ne.s32.totalorder %s108, %s111
      %p117 = scmp.eq.s32.totalorder %s18, 0
      %p118 = por %p116, %p117
      %p119 = scmp.ne.s32.totalorder %s108, %s111
      %p120 = scmp.eq.s32.totalorder %s23, 1
      %p121 = por %p119, %p120
      %p122 = scmp.ne.s32.totalorder %s111, %s112
      %p123 = scmp.eq.s32.totalorder %s23, 0
      %p124 = por %p122, %p123
      %p125 = scmp.ne.s32.totalorder %s111, %s112
      %p126 = scmp.eq.s32.totalorder %s24, 1
      %p127 = por %p125, %p126
      %p129 = scmp.ne.s32.totalorder %s112, %s128
      %p130 = scmp.eq.s32.totalorder %s24, 0
      %p131 = por %p129, %p130
      %s132 = ssub.s32 %s26, %s33
      %p133 = scmp.eq.s32.totalorder %s132, 0
      %s135 = sadd.s32 %s134, 1
      %s136 = scalar_select %p133, %s134, %s135
      %p139 = pneg %p133
      %p140 = scmp.eq.s32.totalorder %s18, 1
      %p141 = por %p139, %p140
      %p142 = scmp.ne.s32.totalorder %s134, %s137
      %p143 = scmp.eq.s32.totalorder %s18, 0
      %p144 = por %p142, %p143
      %p145 = scmp.ne.s32.totalorder %s134, %s137
      %p146 = scmp.eq.s32.totalorder %s23, 1
      %p147 = por %p145, %p146
      %p148 = scmp.ne.s32.totalorder %s137, %s138
      %p149 = scmp.eq.s32.totalorder %s23, 0
      %p150 = por %p148, %p149
      %p151 = scmp.ne.s32.totalorder %s137, %s138
      %p152 = scmp.eq.s32.totalorder %s24, 1
      %p153 = por %p151, %p152
      %p155 = scmp.ne.s32.totalorder %s138, %s154
      %p156 = scmp.eq.s32.totalorder %s24, 0
      %p157 = por %p155, %p156
      %s158 = ssub.s32 %s25, %s37
      %s159 = ssub.s32 %s26, %s33
      %s160 = sor.u32 %s158, %s159
      %p161 = scmp.eq.s32.totalorder %s160, 0
      %s163 = sadd.s32 %s162, 1
      %s164 = scalar_select %p161, %s162, %s163
      %p167 = pneg %p161
      %p168 = scmp.eq.s32.totalorder %s18, 1
      %p169 = por %p167, %p168
      %p170 = scmp.ne.s32.totalorder %s162, %s165
      %p171 = scmp.eq.s32.totalorder %s18, 0
      %p172 = por %p170, %p171
      %p173 = scmp.ne.s32.totalorder %s162, %s165
      %p174 = scmp.eq.s32.totalorder %s23, 1
      %p175 = por %p173, %p174
      %p176 = scmp.ne.s32.totalorder %s165, %s166
      %p177 = scmp.eq.s32.totalorder %s23, 0
      %p178 = por %p176, %p177
      %p179 = scmp.ne.s32.totalorder %s165, %s166
      %p180 = scmp.eq.s32.totalorder %s24, 1
      %p181 = por %p179, %p180
      %p183 = scmp.ne.s32.totalorder %s166, %s182
      %p184 = scmp.eq.s32.totalorder %s24, 0
      %p185 = por %p183, %p184
      %p186 = scmp.le.s32.totalorder 1, %s18
      %p187 = scmp.lt.s32.totalorder %s18, 3
      %p188 = pnand %p186, %p187
      %p189 = pneg %p188
      // Predicated region
      $region9: #{tpu_custom_call.1} parent=5 // pred_check
        _
      $region10: #{tpu_custom_call.1} parent=5 // pred_check_branch
        %191 = sbr.rel (%p188) target = $region12
      $region11: #{tpu_custom_call.1} parent=5 // pred_region
        %s192 = ssub.s32 %s18, 1
        // Predicated region
        $region13: #{tpu_custom_call.1} parent=11 // pred_check
          %p193 = pneg %p77
        $region14: #{tpu_custom_call.1} parent=11 // pred_check_branch
          %195 = sbr.rel (%p193) target = $region16
        $region15: #{tpu_custom_call.1} parent=11 // pred_region
          %197 = vsyncadd [#allocation7], 0
          %s199 = sshll.u32 %s1, 4
          %s200 = int_to_ptr.hbm [resolvable:$true] %s199
          %s201 = sshll.u32 [#allocation6], 4
          %s202 = int_to_ptr.vmem [resolvable:$true] %s201
          %204 = dma.hbm_to_vmem [thread:$0]  %s200, 16, %s202, [#allocation7]
        $region16: #{tpu_custom_call.1} parent=11 // pred_fallthru
          _
        // Predicated region
        $region17: #{tpu_custom_call.1} parent=11 // pred_check
          %p205 = pneg %p98
        $region18: #{tpu_custom_call.1} parent=11 // pred_check_branch
          %207 = sbr.rel (%p205) target = $region20
        $region19: #{tpu_custom_call.1} parent=11 // pred_region
          _
        $region20: #{tpu_custom_call.1} parent=11 // pred_fallthru
          _
        // Predicated region
        $region21: #{tpu_custom_call.1} parent=11 // pred_check
          %p208 = pneg %p124
        $region22: #{tpu_custom_call.1} parent=11 // pred_check_branch
          %210 = sbr.rel (%p208) target = $region24
        $region23: #{tpu_custom_call.1} parent=11 // pred_region
          %212 = vsyncadd [#allocation7], 0
          %s213 = smul.addr %s28, 4
          %s214 = scalar_lea.hbm %s3, %s213
          %s215 = sshll.u32 %s214, 4
          %s216 = int_to_ptr.hbm [resolvable:$true] %s215
          %s217 = sshll.u32 [#allocation8], 4
          %s218 = int_to_ptr.vmem [resolvable:$true] %s217
          %223 = dma.hbm_to_vmem [thread:$0]  %s216, 1024, %s218, [#allocation7], 64, 64, 4
        $region24: #{tpu_custom_call.1} parent=11 // pred_fallthru
          _
        // Predicated region
        $region25: #{tpu_custom_call.1} parent=11 // pred_check
          %p224 = pneg %p150
        $region26: #{tpu_custom_call.1} parent=11 // pred_check_branch
          %226 = sbr.rel (%p224) target = $region28
        $region27: #{tpu_custom_call.1} parent=11 // pred_region
          %p227 = scmp.lt.s32.totalorder %s28, 0
          %s228 = scalar_select %p227, %s28, 0
          %s229 = scalar_lea.vmem %s4, %s228
        $region28: #{tpu_custom_call.1} parent=11 // pred_fallthru
          _
      $region12: #{tpu_custom_call.1} parent=5 // pred_fallthru
        _
      %p230 = scmp.lt.s32.totalorder %s18, 2
      // Predicated region
      $region29: #{tpu_custom_call.1} parent=5 // pred_check
        %p231 = pneg %p230
      $region30: #{tpu_custom_call.1} parent=5 // pred_check_branch
        %233 = sbr.rel (%p231) target = $region32
      $region31: #{tpu_custom_call.1} parent=5 // pred_region
        // Predicated region
        $region33: #{tpu_custom_call.1} parent=31 // pred_check
          %p234 = pneg %p50
        $region34: #{tpu_custom_call.1} parent=31 // pred_check_branch
          %236 = sbr.rel (%p234) target = $region36
        $region35: #{tpu_custom_call.1} parent=31 // pred_region
          %s237 = sand.u32 %s40, 1
          %s238 = scalar_lea.sflag [#allocation4], %s237
          %s239 = sand.u32 %s40, 1
          %s240 = smul.addr %s239, 8
          %s241 = scalar_lea.vmem [#allocation3], %s240
          %243 = vsyncadd %s238, 0
          %s244 = smul.addr %s25, 8
          %s245 = scalar_lea.hbm %s0, %s244
          %s247 = sshll.u32 %s245, 4
          %s248 = int_to_ptr.hbm [resolvable:$true] %s247
          %s249 = sshll.u32 %s241, 4
          %s250 = int_to_ptr.vmem [resolvable:$true] %s249
          %252 = dma.hbm_to_vmem [thread:$0]  %s248, 128, %s250, %s238
        $region36: #{tpu_custom_call.1} parent=31 // pred_fallthru
          _
      $region32: #{tpu_custom_call.1} parent=5 // pred_fallthru
        _
      %p253 = scmp.le.s32.totalorder 1, %s18
      %p254 = scmp.lt.s32.totalorder %s18, 3
      %p255 = pnand %p253, %p254
      %p256 = pneg %p255
      // Predicated region
      $region37: #{tpu_custom_call.1} parent=5 // pred_check
        _
      $region38: #{tpu_custom_call.1} parent=5 // pred_check_branch
        %258 = sbr.rel (%p255) target = $region40
      $region39: #{tpu_custom_call.1} parent=5 // pred_region
        %s259 = ssub.s32 %s18, 1
        %s260 = sand.u32 %s43, 1
        %s261 = scalar_lea.sflag [#allocation4], %s260
        %s262 = sand.u32 %s43, 1
        %s263 = smul.addr %s262, 8
        %s264 = scalar_lea.vmem [#allocation3], %s263
        // Predicated region
        $region41: #{tpu_custom_call.1} parent=39 // pred_check
          %p265 = pneg %p56
        $region42: #{tpu_custom_call.1} parent=39 // pred_check_branch
          %267 = sbr.rel (%p265) target = $region44
        $region43: #{tpu_custom_call.1} parent=39 // pred_region
          %269 = dma.done %s261, 128
        $region44: #{tpu_custom_call.1} parent=39 // pred_fallthru
          _
        // Predicated region
        $region45: #{tpu_custom_call.1} parent=39 // pred_check
          %p270 = pneg %p77
        $region46: #{tpu_custom_call.1} parent=39 // pred_check_branch
          %272 = sbr.rel (%p270) target = $region48
        $region47: #{tpu_custom_call.1} parent=39 // pred_region
          %274 = dma.done [#allocation7], 16
        $region48: #{tpu_custom_call.1} parent=39 // pred_fallthru
          _
        // Predicated region
        $region49: #{tpu_custom_call.1} parent=39 // pred_check
          %p275 = pneg %p124
        $region50: #{tpu_custom_call.1} parent=39 // pred_check_branch
          %277 = sbr.rel (%p275) target = $region52
        $region51: #{tpu_custom_call.1} parent=39 // pred_region
          %279 = dma.done [#allocation7], 1024
        $region52: #{tpu_custom_call.1} parent=39 // pred_fallthru
          _
        %s280 = sand.u32 %s43, 1
        %s281 = scalar_lea.sflag [#allocation4], %s280
        %s282 = sand.u32 %s43, 1
        %s283 = smul.addr %s282, 8
        %s284 = scalar_lea.vmem [#allocation3], %s283
        %p285 = pneg %p56
        %p286 = pneg %p53
        %p287 = pneg %p77
        %p288 = pneg %p74
        %p289 = pneg %p98
        %p290 = pneg %p95
        %p291 = pneg %p124
        %p292 = pneg %p121
        %p293 = scmp.lt.s32.totalorder %s28, 0
        %s294 = scalar_select %p293, %s28, 0
        %s295 = scalar_lea.vmem %s4, %s294
        %p296 = pneg %p150
        %p297 = pneg %p147
        %p298 = pneg %p178
        %p299 = pneg %p175
        %s300 = sand.u32 %s165, 1
        %s301 = scalar_lea.sflag [#allocation5], %s300
        %s302 = sand.u32 %s165, 1
        %s303 = smul.addr %s302, 8
        %s304 = scalar_lea.vmem [#allocation9], %s303
        %p305 = scmp.lt.s32.totalorder %s28, 0
        %s306 = scalar_select %p305, %s28, 0
        %s307 = scalar_lea.vmem %s4, %s306
        %p308 = scmp.eq.s32.totalorder %s28, 0
        // Predicated region
        $region53: #{tpu_custom_call.1} parent=39 // pred_check
          %p309 = pneg %p308
        $region54: #{tpu_custom_call.1} parent=39 // pred_check_branch
          %311 = sbr.rel (%p309) target = $region56
        $region55: #{tpu_custom_call.1} parent=39 // pred_region
          %v312 = vld [vmem:[%s264] sm:$0xff]
          %313 = vadd.xlane.f32.xlu0 %v312
          %v314 = vpop.xlane.xlu0 %313
          %v315 = vrcp.pop 128.0
          %v316 = vmul.f32 128.0, %v315
          %v317 = vsub.f32 1.0, %v316
          %v318 = vmul.f32 %v315, %v317
          %v319 = vadd.f32 %v315, %v318
          %vm320 = vweird.f32 %v315
          %v321 = vsel %vm320, %v315, %v319
          %v322 = vmul.f32 %v314, %v321
          %v323 = vsub.f32 %v312, %v322
          %v324 = vmul.f32 %v323, %v323
          %325 = vadd.xlane.f32.xlu0 %v324
          %v326 = vpop.xlane.xlu0 %325
          %v327 = vmul.f32 %v326, %v321
          %v328 = vadd.f32 %v327, 1e-05
          %v329 = vrsqrt.pop %v328
          %v330 = vmul.f32 %v329, %v328
          %v331 = vmul.f32 %v330, %v329
          %v332 = vmul.f32 0.5, %v331
          %v333 = vsub.f32 1.5, %v332
          %v334 = vmul.f32 %v329, %v333
          %vm335 = vweird.f32 %v328
          %vm336 = vweird.f32 %v329
          %vm337 = vmor %vm335, %vm336
          %v338 = vsel %vm337, %v329, %v334
          %v339 = vmul.f32 %v323, %v338
          %v340 = vld [vmem:[#allocation6] sm:$0x1]
          %v342 = vperm.slane %v340, 0
          %v344 = vmul.f32 %v339, %v342
          %v345 = vld [vmem:[%s2] sm:$0x1]
          %v347 = vperm.slane %v345, 0
          %v349 = vadd.f32 %v344, %v347
          %v350 = vpack.c.bf16 %v349, %v349
          %351 = vst [vmem:[#allocation2] sm:$0xf] %v350
        $region56: #{tpu_custom_call.1} parent=39 // pred_fallthru
          _
        %v352 = vld [vmem:[#allocation2] sm:$0xf]
        %v353 = vld [vmem:[#allocation8] sm:$0xf]
        %v354 = vld [vmem:[#allocation8 + $0x4] sm:$0xf]
        %v355 = vld [vmem:[#allocation8 + $0x8] sm:$0xf]
        %v356 = vld [vmem:[#allocation8 + $0xc] sm:$0xf]
        %v357 = vld [vmem:[#allocation8 + $0x10] sm:$0xf]
        %v358 = vld [vmem:[#allocation8 + $0x14] sm:$0xf]
        %v359 = vld [vmem:[#allocation8 + $0x18] sm:$0xf]
        %v360 = vld [vmem:[#allocation8 + $0x1c] sm:$0xf]
        %v361 = vld [vmem:[#allocation8 + $0x20] sm:$0xf]
        %v362 = vld [vmem:[#allocation8 + $0x24] sm:$0xf]
        %v363 = vld [vmem:[#allocation8 + $0x28] sm:$0xf]
        %v364 = vld [vmem:[#allocation8 + $0x2c] sm:$0xf]
        %v365 = vld [vmem:[#allocation8 + $0x30] sm:$0xf]
        %v366 = vld [vmem:[#allocation8 + $0x34] sm:$0xf]
        %v367 = vld [vmem:[#allocation8 + $0x38] sm:$0xf]
        %v368 = vld [vmem:[#allocation8 + $0x3c] sm:$0xf]
        %v369 = vld [vmem:[%s307] sm:$0x1]
        %v371 = vperm.slane %v369, 0
        %v389 = vunpack.c.l.b16 %v353
        %v390 = vunpack.c.l.b16 %v354
        %v391 = vunpack.c.l.b16 %v355
        %v392 = vunpack.c.l.b16 %v356
        %v393 = vunpack.c.l.b16 %v357
        %v394 = vunpack.c.l.b16 %v358
        %v395 = vunpack.c.l.b16 %v359
        %v396 = vunpack.c.l.b16 %v360
        %v397 = vunpack.c.l.b16 %v361
        %v398 = vunpack.c.l.b16 %v362
        %v399 = vunpack.c.l.b16 %v363
        %v400 = vunpack.c.l.b16 %v364
        %v401 = vunpack.c.l.b16 %v365
        %v402 = vunpack.c.l.b16 %v366
        %v403 = vunpack.c.l.b16 %v367
        %v404 = vunpack.c.l.b16 %v368
        %v405 = vpack.c.b16 %v390, %v389
        %v406 = vpack.c.b16 %v392, %v391
        %v407 = vpack.c.b16 %v394, %v393
        %v408 = vpack.c.b16 %v396, %v395
        %v409 = vpack.c.b16 %v398, %v397
        %v410 = vpack.c.b16 %v400, %v399
        %v411 = vpack.c.b16 %v402, %v401
        %v412 = vpack.c.b16 %v404, %v403
        %421 = vmatpush.bf16.msra.mxu0 %v412
        %422 = vmatpush.bf16.msra.mxu0 %v411
        %423 = vmatpush.bf16.msra.mxu0 %v410
        %424 = vmatpush.bf16.msra.mxu0 %v409
        %425 = vmatpush.bf16.msra.mxu0 %v408
        %426 = vmatpush.bf16.msra.mxu0 %v407
        %427 = vmatpush.bf16.msra.mxu0 %v406
        %428 = vmatpush.bf16.msra.mxu0 %v405
        %429 = vmatmul.bf16.gmra.mxu0 %v352
        %v430 = vpop.f32.mrf.mxu0
        %v431 = vadd.f32 %v371, %v430
        %v432 = vpop.f32.mrf.mxu0
        %433 = vdwg.mxu0
        %434 = vst [vmem:[%s304] sm:$0xff] %v431
        %s435 = sand.u32 %s165, 1
        %s436 = scalar_lea.sflag [#allocation5], %s435
        %s437 = sand.u32 %s165, 1
        %s438 = smul.addr %s437, 8
        %s439 = scalar_lea.vmem [#allocation9], %s438
        // Predicated region
        $region57: #{tpu_custom_call.1} parent=39 // pred_check
          %p440 = pneg %p175
        $region58: #{tpu_custom_call.1} parent=39 // pred_check_branch
          %442 = sbr.rel (%p440) target = $region60
        $region59: #{tpu_custom_call.1} parent=39 // pred_region
          %444 = vsyncadd %s436, 0
          %s445 = sadd.s32 %s28, %s27
          %s446 = smul.addr %s445, 8
          %s447 = scalar_lea.hbm %s5, %s446
          %s449 = sshll.u32 %s439, 4
          %s450 = int_to_ptr.vmem [resolvable:$true] %s449
          %s451 = sshll.u32 %s447, 4
          %s452 = int_to_ptr.hbm [resolvable:$true] %s451
          %454 = dma.vmem_to_hbm [thread:$0]  %s450, 128, %s452, %s436
        $region60: #{tpu_custom_call.1} parent=39 // pred_fallthru
          _
      $region40: #{tpu_custom_call.1} parent=5 // pred_fallthru
        _
      %p455 = scmp.le.s32.totalorder 2, %s18
      // Predicated region
      $region61: #{tpu_custom_call.1} parent=5 // pred_check
        %p456 = pneg %p455
      $region62: #{tpu_custom_call.1} parent=5 // pred_check_branch
        %458 = sbr.rel (%p456) target = $region64
      $region63: #{tpu_custom_call.1} parent=5 // pred_region
        %s459 = ssub.s32 %s18, 2
        // Predicated region
        $region65: #{tpu_custom_call.1} parent=63 // pred_check
          %p460 = pneg %p181
        $region66: #{tpu_custom_call.1} parent=63 // pred_check_branch
          %462 = sbr.rel (%p460) target = $region68
        $region67: #{tpu_custom_call.1} parent=63 // pred_region
          %s463 = sand.u32 %s166, 1
          %s464 = scalar_lea.sflag [#allocation5], %s463
          %s465 = sand.u32 %s166, 1
          %s466 = smul.addr %s465, 8
          %s467 = scalar_lea.vmem [#allocation9], %s466
          %469 = dma.done %s464, 128
        $region68: #{tpu_custom_call.1} parent=63 // pred_fallthru
          _
      $region64: #{tpu_custom_call.1} parent=5 // pred_fallthru
        _
    $region6: #{tpu_custom_call.1} parent=1 // loop_footer
      %s22 = sadd.s32 1, %s18
    $region7: #{tpu_custom_call.1} parent=1 // loop_footer_branch
      %17 = sbr.rel target = $region3
    $region8: #{tpu_custom_call.1} parent=1 // loop_exit
      _
    %470 = vsyncpa [#allocation4], 1
    %s471 = scalar_lea.sflag [#allocation4], 1
    %472 = vsyncpa %s471, 1
    %473 = vsyncpa [#allocation7], 1
    %474 = vsyncpa [#allocation5], 1
    %s475 = scalar_lea.sflag [#allocation5], 1
    %476 = vsyncpa %s475, 1

</llo_original>
